<compile_context>
chip_gen: v6e
topology: v6e:2x2x1
jax: 0.10.0
libtpu: 0.0.40
codegen_flags: <defaults>
</compile_context>

<pallas_src>
import jax
import jax.numpy as jnp
from jax.experimental import pallas as pl
from jax.experimental.pallas import tpu as pltpu


# ------------------------------- Pallas kernel ------------------------------- #

def _head_kernel(x_ref, w_ref, b_ref, o_ref):
    # x_ref: (Cin, T) f32   w_ref: (Cout, Cin) f32   b_ref: (Cout, 1) f32
    # In-kernel bf16 cast (VPU, hidden behind DMA) -> no standalone HBM convert pass.
    x = x_ref[...].astype(jnp.bfloat16)
    w = w_ref[...].astype(jnp.bfloat16)
    y = jnp.dot(w, x, preferred_element_type=jnp.float32)   # (Cout, T), f32 acc
    y = y + b_ref[...]                                       # bias broadcast over lanes
    # sigmoid: exp + approx reciprocal both ride the EUP slot (no VPU divide).
    o_ref[...] = pl.reciprocal(1.0 + jnp.exp(-y), approx=True)


# ------------------------------- host wrapper -------------------------------- #

def _pick_spatial_tile(hw, cin, cout, n_batch,
                       vmem_budget_bytes=12 << 20, max_tile=32768):
    """Spatial (lane) tile: multiple of 128, bounded by a per-step VMEM budget.

    Budget counts the double-buffered f32 activation block + f32 output block, so
    it stays well inside the default scoped VMEM limit on v5e/v6e (128 MiB) and
    v7x (32 MiB scoped / 64 MiB physical).
    """
    if hw <= 128:
        return hw                                  # full-extent block is always legal
    bytes_per_col = 2 * (cin + cout) * 4           # double-buffered f32 in + f32 out
    cap = max(128, min(max_tile, vmem_budget_bytes // bytes_per_col) // 128 * 128)
    t = min(cap, hw // 128 * 128)
    if n_batch == 1 and hw >= 256:
        # keep >= 2 spatial blocks so v7x's second TensorCore isn't idle
        t = min(t, max(128, (hw // 2) // 128 * 128))
    return t


def head_forward(feature_nchw, weight, bias):
    """sigmoid(1x1 conv) on an NCHW feature map, fully fused in one pallas_call.

    weight: (Cout, Cin, 1, 1) PyTorch Conv2d layout; bias: (Cout,).
    Returns NCHW float32 output, matching the PyTorch module.
    """
    N, Cin, H, W = feature_nchw.shape
    Cout = weight.shape[0]
    HW = H * W
    T = _pick_spatial_tile(HW, Cin, Cout, N)

    # NCHW -> (N, Cin, H*W): pure reshape, no HBM relayout, no dtype convert.
    x = feature_nchw.reshape(N, Cin, HW)
    w = weight.reshape(Cout, Cin)
    b = bias.reshape(Cout, 1).astype(jnp.float32)

    grid = (N, pl.cdiv(HW, T))   # boundary spatial block (if any) is masked by Pallas

    out = pl.pallas_call(
        _head_kernel,
        grid=grid,
        in_specs=[
            # activations: one batch image, one spatial tile (lanes = T)
            pl.BlockSpec((None, Cin, T), lambda n, s: (n, 0, s)),
            # weight / bias: tiny constants, same block every grid step
            pl.BlockSpec((Cout, Cin), lambda n, s: (0, 0)),
            pl.BlockSpec((Cout, 1), lambda n, s: (0, 0)),
        ],
        out_specs=pl.BlockSpec((None, Cout, T), lambda n, s: (n, 0, s)),
        out_shape=jax.ShapeDtypeStruct((N, Cout, HW), jnp.float32),
        compiler_params=pltpu.CompilerParams(
            dimension_semantics=("parallel", "parallel")),
    )(x, w, b)

    return out.reshape(N, Cout, H, W)


# ---------------------------------- params ----------------------------------- #

def init_params(key, in_chs, num_classes):
    kw, kb = jax.random.split(key)
    weight = 0.1 * jax.random.normal(kw, (num_classes, in_chs, 1, 1), jnp.float32)
    bias = 0.01 * jax.random.normal(kb, (num_classes,), jnp.float32)
    return {"w": weight, "b": bias}


def forward(params, feature_nchw):
    return head_forward(feature_nchw, params["w"], params["b"])


# ----------------------------------- main ------------------------------------ #

if __name__ == "__main__":
    key = jax.random.PRNGKey(0)
    k_x, k_p = jax.random.split(key)

    batch, in_chs, spatial, num_classes = 2, 32, 16, 3
    feature = jax.random.normal(k_x, (batch, in_chs, spatial, spatial), jnp.float32)
    params = init_params(k_p, in_chs=in_chs, num_classes=num_classes)

    out = jax.jit(forward)(params, feature)
    out = jax.block_until_ready(out)

    assert out.shape == (batch, num_classes, spatial, spatial), out.shape
    assert jnp.all(jnp.isfinite(out))
    assert jnp.all((out >= 0.0) & (out <= 1.0))

    # Pure-JAX f32 reference (1x1 conv + sigmoid); loose tol for the deliberate
    # in-kernel bf16 matmul cast + approx reciprocal.
    w2d = params["w"].reshape(num_classes, in_chs)
    ref = jax.nn.sigmoid(
        jnp.einsum("oc,nchw->nohw", w2d, feature)
        + params["b"].reshape(1, num_classes, 1, 1))
    assert jnp.max(jnp.abs(out - ref)) < 3e-2, float(jnp.max(jnp.abs(out - ref)))

    print("KERNEL_OK")
</pallas_src>

<mosaic_0001>
module attributes {stable_mosaic.version = 11 : i64} {
  func.func @_head_kernel(%arg0: i32, %arg1: i32, %arg2: memref<1x32x256xf32, #tpu.memory_space<vmem>>, %arg3: memref<3x32xf32, #tpu.memory_space<vmem>>, %arg4: memref<3x1xf32, #tpu.memory_space<vmem>>, %arg5: memref<1x3x256xf32, #tpu.memory_space<vmem>>) attributes {dimension_semantics = [#tpu.dimension_semantics<parallel>, #tpu.dimension_semantics<parallel>], iteration_bounds = array<i64: 2, 1>, scalar_prefetch = 0 : i64, scratch_operands = 0 : i64, tpu.core_type = #tpu.core_type<tc>, window_params = [{transform_indices = @transform_0, window_bounds = array<i64: 1, 32, 256>}, {pipeline_mode = #tpu.pipeline_mode<synchronous>, transform_indices = @transform_1, window_bounds = array<i64: 3, 32>}, {pipeline_mode = #tpu.pipeline_mode<synchronous>, transform_indices = @transform_2, window_bounds = array<i64: 3, 1>}, {transform_indices = @transform_3, window_bounds = array<i64: 1, 3, 256>}]} {
    %c0 = arith.constant 0 : index
    %c0_0 = arith.constant 0 : index
    %c0_1 = arith.constant 0 : index
    %0 = vector.load %arg2[%c0, %c0_0, %c0_1] : memref<1x32x256xf32, #tpu.memory_space<vmem>>, vector<1x32x256xf32>
    %1 = vector.shape_cast %0 : vector<1x32x256xf32> to vector<32x256xf32>
    %2 = arith.truncf %1 : vector<32x256xf32> to vector<32x256xbf16>
    %c0_2 = arith.constant 0 : index
    %c0_3 = arith.constant 0 : index
    %3 = vector.load %arg3[%c0_2, %c0_3] : memref<3x32xf32, #tpu.memory_space<vmem>>, vector<3x32xf32>
    %4 = arith.truncf %3 : vector<3x32xf32> to vector<3x32xbf16>
    %cst = arith.constant dense<0.000000e+00> : vector<3x256xf32>
    %5 = tpu.matmul %4, %2, %cst {dimension_numbers = #tpu.dot_dimension_numbers<[1], [0], [0], [1], [0, 0, 1, 1], [], []>} : vector<3x32xbf16>, vector<32x256xbf16>, vector<3x256xf32> -> vector<3x256xf32>
    %c0_4 = arith.constant 0 : index
    %c0_5 = arith.constant 0 : index
    %6 = vector.load %arg4[%c0_4, %c0_5] : memref<3x1xf32, #tpu.memory_space<vmem>>, vector<3x1xf32>
    %7 = vector.broadcast %6 : vector<3x1xf32> to vector<3x256xf32>
    %8 = arith.addf %5, %7 : vector<3x256xf32>
    %cst_6 = arith.constant 0.000000e+00 : f32
    %9 = vector.broadcast %cst_6 : f32 to vector<3x256xf32>
    %10 = arith.subf %9, %8 : vector<3x256xf32>
    %11 = math.exp %10 : vector<3x256xf32>
    %cst_7 = arith.constant 1.000000e+00 : f32
    %12 = vector.broadcast %cst_7 : f32 to vector<3x256xf32>
    %13 = arith.addf %12, %11 : vector<3x256xf32>
    %14 = tpu.reciprocal %13 {approx = true} : vector<3x256xf32> -> vector<3x256xf32>
    %c0_8 = arith.constant 0 : index
    %c0_9 = arith.constant 0 : index
    %c0_10 = arith.constant 0 : index
    %15 = vector.load %arg5[%c0_8, %c0_9, %c0_10] : memref<1x3x256xf32, #tpu.memory_space<vmem>>, vector<1x3x256xf32>
    %16 = vector.shape_cast %15 : vector<1x3x256xf32> to vector<3x256xf32>
    %17 = vector.shape_cast %14 : vector<3x256xf32> to vector<1x3x256xf32>
    tpu.vector_store %arg5[%c0_8, %c0_9, %c0_10], %17 {strides = array<i32>} : memref<1x3x256xf32, #tpu.memory_space<vmem>>, vector<1x3x256xf32>,
    return
  }
  func.func @transform_0(%arg0: i32, %arg1: i32) -> (i32, i32, i32) {
    %c0_i32 = arith.constant 0 : i32
    %c0_i32_0 = arith.constant 0 : i32
    return %arg0, %c0_i32, %arg1 : i32, i32, i32
  }
  func.func @transform_1(%arg0: i32, %arg1: i32) -> (i32, i32) {
    %c0_i32 = arith.constant 0 : i32
    %c0_i32_0 = arith.constant 0 : i32
    %c0_i32_1 = arith.constant 0 : i32
    return %c0_i32, %c0_i32_0 : i32, i32
  }
  func.func @transform_2(%arg0: i32, %arg1: i32) -> (i32, i32) {
    %c0_i32 = arith.constant 0 : i32
    %c0_i32_0 = arith.constant 0 : i32
    %c0_i32_1 = arith.constant 0 : i32
    return %c0_i32, %c0_i32_0 : i32, i32
  }
  func.func @transform_3(%arg0: i32, %arg1: i32) -> (i32, i32, i32) {
    %c0_i32 = arith.constant 0 : i32
    %c0_i32_0 = arith.constant 0 : i32
    return %arg0, %c0_i32, %arg1 : i32, i32, i32
  }
}

</mosaic_0001>

<llo_original>
// kernel: forward.1
$region0: #{forward.1}
  #allocation0 [shape = 'u32[]', space=smem, size = 0x4, offset = 0x4, fixed_abs, tag = 'smem constant byte address 0x4 - core index']
  #allocation1 [shape = 'u32[144,128]{1,0:T(1,128)}', space=vmem, size = 0x12000, scoped, tag = 'internal scratch']
  %s0 = inlined_call_operand.vmem [shape: f32[2,32,256], index: 0, kind: input, shape index: {}]
  %s1 = inlined_call_operand.vmem [shape: f32[3,32], index: 1, kind: input, shape index: {}]
  %s2 = inlined_call_operand.vmem [shape: f32[3,1], index: 2, kind: input, shape index: {}]
  %s3 = inlined_call_operand.vmem [shape: f32[2,3,256], index: 3, kind: output, shape index: {}]
  %s4 = sld [smem:[#allocation0]]
  $region45: #{forward.1} parent=0
    _
  %s6 = ssub.s32 1, %s4
  %s7 = scalar_select 0, %s6, %s4
  loop: start=0, step=1, limit=4
  $region2: #{forward.1} parent=0 // loop_pre_header
    _
  $region3: #{forward.1} parent=0 // loop_header
    %s9 = sphi 0, %s13
    %p10 = scmp.ge.s32.totalorder %s9, 4
    %s16 = sphi 0, %s28
    %s17 = sphi 0, %s24
    %s18 = sphi 0, %s16
    %s19 = sphi 0, %s17
    %s20 = sphi 0, %s18
    %s21 = sphi 0, %s19
    %s33 = sphi 0, %s35
    %s36 = sphi 0, %s33
    %s37 = sphi 0, %s36
    %s53 = sphi 0, %s37
    %s57 = sphi 0, %s57
    %s59 = sphi 0, %s57
    %s60 = sphi 0, %s59
    %s74 = sphi 0, %s60
    %s78 = sphi 0, %s78
    %s80 = sphi 0, %s78
    %s81 = sphi 0, %s80
    %s95 = sphi 0, %s81
    %s103 = sphi 0, %s105
    %s106 = sphi 0, %s103
    %s107 = sphi 0, %s106
    %s123 = sphi 0, %s107
  $region4: #{forward.1} parent=0 // loop_header_branch
    %12 = sbr.rel (%p10) target = $region8
  $region5: #{forward.1} parent=0 // loop_body
    %s14 = ssub.s32 %s9, 1
    %s15 = ssub.s32 %s9, 2
    %s22 = sadd.s32 1, %s17
    %p23 = scmp.ge.s32.totalorder %s22, 1
    %s24 = scalar_select %p23, 0, %s22
    %s25 = sadd.s32 1, %s16
    %s26 = scalar_select %p23, %s25, %s16
    %p27 = scmp.ge.s32.totalorder %s26, 2
    %s28 = scalar_select %p27, 0, %s26
    %s29 = ssub.s32 %s16, %s28
    %s30 = ssub.s32 %s17, %s24
    %s31 = sor.u32 %s29, %s30
    %p32 = scmp.eq.s32.totalorder %s31, 0
    %s34 = sadd.s32 %s33, 1
    %s35 = scalar_select %p32, %s33, %s34
    %p38 = pneg %p32
    %p39 = scmp.eq.s32.totalorder %s9, 1
    %p40 = por %p38, %p39
    %p41 = scmp.ne.s32.totalorder %s33, %s36
    %p42 = scmp.eq.s32.totalorder %s9, 0
    %p43 = por %p41, %p42
    %p44 = scmp.ne.s32.totalorder %s33, %s36
    %p45 = scmp.eq.s32.totalorder %s14, 1
    %p46 = por %p44, %p45
    %p47 = scmp.ne.s32.totalorder %s36, %s37
    %p48 = scmp.eq.s32.totalorder %s14, 0
    %p49 = por %p47, %p48
    %p50 = scmp.ne.s32.totalorder %s36, %s37
    %p51 = scmp.eq.s32.totalorder %s15, 1
    %p52 = por %p50, %p51
    %p54 = scmp.ne.s32.totalorder %s37, %s53
    %p55 = scmp.eq.s32.totalorder %s15, 0
    %p56 = por %p54, %p55
    %s58 = sadd.s32 %s57, 1
    %p61 = scmp.eq.s32.totalorder %s9, 1
    %p62 = scmp.ne.s32.totalorder %s57, %s59
    %p63 = scmp.eq.s32.totalorder %s9, 0
    %p64 = por %p62, %p63
    %p65 = scmp.ne.s32.totalorder %s57, %s59
    %p66 = scmp.eq.s32.totalorder %s14, 1
    %p67 = por %p65, %p66
    %p68 = scmp.ne.s32.totalorder %s59, %s60
    %p69 = scmp.eq.s32.totalorder %s14, 0
    %p70 = por %p68, %p69
    %p71 = scmp.ne.s32.totalorder %s59, %s60
    %p72 = scmp.eq.s32.totalorder %s15, 1
    %p73 = por %p71, %p72
    %p75 = scmp.ne.s32.totalorder %s60, %s74
    %p76 = scmp.eq.s32.totalorder %s15, 0
    %p77 = por %p75, %p76
    %s79 = sadd.s32 %s78, 1
    %p82 = scmp.eq.s32.totalorder %s9, 1
    %p83 = scmp.ne.s32.totalorder %s78, %s80
    %p84 = scmp.eq.s32.totalorder %s9, 0
    %p85 = por %p83, %p84
    %p86 = scmp.ne.s32.totalorder %s78, %s80
    %p87 = scmp.eq.s32.totalorder %s14, 1
    %p88 = por %p86, %p87
    %p89 = scmp.ne.s32.totalorder %s80, %s81
    %p90 = scmp.eq.s32.totalorder %s14, 0
    %p91 = por %p89, %p90
    %p92 = scmp.ne.s32.totalorder %s80, %s81
    %p93 = scmp.eq.s32.totalorder %s15, 1
    %p94 = por %p92, %p93
    %p96 = scmp.ne.s32.totalorder %s81, %s95
    %p97 = scmp.eq.s32.totalorder %s15, 0
    %p98 = por %p96, %p97
    %s99 = ssub.s32 %s16, %s28
    %s100 = ssub.s32 %s17, %s24
    %s101 = sor.u32 %s99, %s100
    %p102 = scmp.eq.s32.totalorder %s101, 0
    %s104 = sadd.s32 %s103, 1
    %s105 = scalar_select %p102, %s103, %s104
    %p108 = pneg %p102
    %p109 = scmp.eq.s32.totalorder %s9, 1
    %p110 = por %p108, %p109
    %p111 = scmp.ne.s32.totalorder %s103, %s106
    %p112 = scmp.eq.s32.totalorder %s9, 0
    %p113 = por %p111, %p112
    %p114 = scmp.ne.s32.totalorder %s103, %s106
    %p115 = scmp.eq.s32.totalorder %s14, 1
    %p116 = por %p114, %p115
    %p117 = scmp.ne.s32.totalorder %s106, %s107
    %p118 = scmp.eq.s32.totalorder %s14, 0
    %p119 = por %p117, %p118
    %p120 = scmp.ne.s32.totalorder %s106, %s107
    %p121 = scmp.eq.s32.totalorder %s15, 1
    %p122 = por %p120, %p121
    %p124 = scmp.ne.s32.totalorder %s107, %s123
    %p125 = scmp.eq.s32.totalorder %s15, 0
    %p126 = por %p124, %p125
    %p127 = scmp.le.s32.totalorder 1, %s9
    %p128 = scmp.lt.s32.totalorder %s9, 3
    %p129 = pnand %p127, %p128
    %p130 = pneg %p129
    // Predicated region
    $region9: #{forward.1} parent=5 // pred_check
      _
    $region10: #{forward.1} parent=5 // pred_check_branch
      %132 = sbr.rel (%p129) target = $region12
    $region11: #{forward.1} parent=5 // pred_region
      %s133 = ssub.s32 %s9, 1
      // Predicated region
      $region13: #{forward.1} parent=11 // pred_check
        %p134 = pneg %p70
      $region14: #{forward.1} parent=11 // pred_check_branch
        %136 = sbr.rel (%p134) target = $region16
      $region15: #{forward.1} parent=11 // pred_region
        _
      $region16: #{forward.1} parent=11 // pred_fallthru
        _
      // Predicated region
      $region17: #{forward.1} parent=11 // pred_check
        %p137 = pneg %p91
      $region18: #{forward.1} parent=11 // pred_check_branch
        %139 = sbr.rel (%p137) target = $region20
      $region19: #{forward.1} parent=11 // pred_region
        _
      $region20: #{forward.1} parent=11 // pred_fallthru
        _
    $region12: #{forward.1} parent=5 // pred_fallthru
      _
    %p140 = scmp.lt.s32.totalorder %s9, 2
    // Predicated region
    $region21: #{forward.1} parent=5 // pred_check
      %p141 = pneg %p140
    $region22: #{forward.1} parent=5 // pred_check_branch
      %143 = sbr.rel (%p141) target = $region24
    $region23: #{forward.1} parent=5 // pred_region
      // Predicated region
      $region25: #{forward.1} parent=23 // pred_check
        %p144 = pneg %p43
      $region26: #{forward.1} parent=23 // pred_check_branch
        %146 = sbr.rel (%p144) target = $region28
      $region27: #{forward.1} parent=23 // pred_region
        %s147 = smul.u32 2, %s17
        %p148 = scmp.lt.s32.totalorder %s16, 1
        %s149 = scalar_select %p148, %s16, 1
        %p150 = scmp.lt.s32.totalorder %s147, 1
        %s151 = scalar_select %p150, %s147, 1
        %s152 = smul.addr %s149, 8
        %s153 = sadd.s32 %s151, %s152
        %s154 = smul.addr %s153, 8
        %s155 = scalar_lea.vmem %s0, %s154
        %s156 = smul.u32 2, %s17
      $region28: #{forward.1} parent=23 // pred_fallthru
        _
    $region24: #{forward.1} parent=5 // pred_fallthru
      _
    %p157 = scmp.le.s32.totalorder 1, %s9
    %p158 = scmp.lt.s32.totalorder %s9, 3
    %p159 = pnand %p157, %p158
    %p160 = pneg %p159
    // Predicated region
    $region29: #{forward.1} parent=5 // pred_check
      _
    $region30: #{forward.1} parent=5 // pred_check_branch
      %162 = sbr.rel (%p159) target = $region32
    $region31: #{forward.1} parent=5 // pred_region
      %s163 = ssub.s32 %s9, 1
      %s164 = smul.u32 2, %s19
      %p165 = scmp.lt.s32.totalorder %s18, 1
      %s166 = scalar_select %p165, %s18, 1
      %p167 = scmp.lt.s32.totalorder %s164, 1
      %s168 = scalar_select %p167, %s164, 1
      %s169 = smul.addr %s166, 8
      %s170 = sadd.s32 %s168, %s169
      %s171 = smul.addr %s170, 8
      %s172 = scalar_lea.vmem %s0, %s171
      %p173 = pneg %p49
      %p174 = pneg %p46
      %p175 = pneg %p70
      %p176 = pneg %p67
      %p177 = pneg %p91
      %p178 = pneg %p88
      %p179 = pneg %p119
      %p180 = pneg %p116
      %s181 = smul.u32 2, %s19
      %p182 = scmp.lt.s32.totalorder %s18, 1
      %s183 = scalar_select %p182, %s18, 1
      %p184 = scmp.lt.s32.totalorder %s181, 1
      %s185 = scalar_select %p184, %s181, 1
      %s186 = smul.addr %s183, 2
      %s187 = sadd.s32 %s185, %s186
      %s188 = smul.addr %s187, 4
      %s189 = scalar_lea.vmem %s3, %s188
      %s190 = smul.u32 2, %s19
      %p191 = scmp.lt.s32.totalorder %s18, 1
      %s192 = scalar_select %p191, %s18, 1
      %p193 = scmp.lt.s32.totalorder %s190, 1
      %s194 = scalar_select %p193, %s190, 1
      %s195 = smul.addr %s192, 8
      %s196 = sadd.s32 %s194, %s195
      %s197 = smul.addr %s196, 8
      %s198 = scalar_lea.vmem %s0, %s197
      %s199 = smul.u32 2, %s19
      %s200 = smul.u32 2, %s19
      %p201 = scmp.lt.s32.totalorder %s18, 1
      %s202 = scalar_select %p201, %s18, 1
      %p203 = scmp.lt.s32.totalorder %s200, 1
      %s204 = scalar_select %p203, %s200, 1
      %s205 = smul.addr %s202, 2
      %s206 = sadd.s32 %s204, %s205
      %s207 = smul.addr %s206, 4
      %s208 = scalar_lea.vmem %s3, %s207
      %s209 = smul.u32 2, %s19
      %v211 = vld [vmem:[%s198] sm:$0xff]
      %v212 = vld [vmem:[%s198 + $0x8] sm:$0xff]
      %v213 = vld [vmem:[%s198 + $0x10] sm:$0xff]
      %v214 = vld [vmem:[%s198 + $0x18] sm:$0xff]
      %v215 = vld [vmem:[%s198 + $0x20] sm:$0xff]
      %v216 = vld [vmem:[%s198 + $0x28] sm:$0xff]
      %v217 = vld [vmem:[%s198 + $0x30] sm:$0xff]
      %v218 = vld [vmem:[%s198 + $0x38] sm:$0xff]
      %v219 = vpack.c.bf16 %v213, %v211
      %v220 = vpack.c.bf16 %v214, %v212
      %v221 = vpack.c.bf16 %v217, %v215
      %v222 = vpack.c.bf16 %v218, %v216
      %v223 = vld [vmem:[%s1] sm:$0x7]
      %v224 = vpack.c.bf16 %v223, %v223
      %v225 = vld [vmem:[%s2] sm:$0x7]
      %227 = vset.pattern.permute.xlu0 0
      %228 = vperm.xlu0 %227, %v225
      %v229 = vpop.permute.xlu0 %228
      %vm231 = vcmask 261120
      %v233 = vsel %vm231, %v224, 0
      %235 = vmatprep.subr.bf16.mxu0 0
      %236 = vmatpush1.bf16.msra.mxu0 0
      %237 = vmatprep.subr.bf16.mxu0 0
      %238 = vmatpush1.bf16.msra.mxu0 0
      %239 = vmatprep.subr.bf16.mxu0 0
      %240 = vmatpush1.bf16.msra.mxu0 0
      %241 = vmatprep.subr.bf16.mxu0 0
      %242 = vmatpush1.bf16.msra.mxu0 0
      %243 = vmatprep.subr.bf16.mxu0 0
      %244 = vmatpush1.bf16.msra.mxu0 0
      %245 = vmatprep.subr.bf16.mxu0 0
      %246 = vmatpush1.bf16.msra.mxu0 0
      %247 = vmatprep.subr.bf16.mxu0 %v222
      %248 = vmatpush1.bf16.msra.mxu0 %v221
      %249 = vmatprep.subr.bf16.mxu0 %v220
      %250 = vmatpush1.bf16.msra.mxu0 %v219
      %251 = vmatprep.subr.bf16.mxu0 0
      %252 = vmatpush2.bf16.msra.mxu0 0
      %253 = vmatprep.subr.bf16.mxu0 0
      %254 = vmatpush2.bf16.msra.mxu0 0
      %255 = vmatprep.subr.bf16.mxu0 0
      %256 = vmatpush2.bf16.msra.mxu0 0
      %257 = vmatprep.subr.bf16.mxu0 0
      %258 = vmatpush2.bf16.msra.mxu0 0
      %259 = vmatprep.subr.bf16.mxu0 0
      %260 = vmatpush2.bf16.msra.mxu0 0
      %261 = vmatprep.subr.bf16.mxu0 0
      %262 = vmatpush2.bf16.msra.mxu0 0
      %263 = vmatprep.subr.bf16.mxu0 0
      %264 = vmatpush2.bf16.msra.mxu0 0
      %265 = vmatprep.subr.bf16.mxu0 0
      %266 = vmatpush2.bf16.msra.mxu0 0
      %267 = vmatprep.mubr.bf16.mxu0 0
      %268 = vmatmul.mubr.bf16.gmra.mxu0 %v233
      %v269 = vpop.f32.mrf.mxu0
      %v270 = vadd.f32 %v229, %v269
      %v271 = vpop.f32.mrf.mxu0
      %v272 = vadd.f32 %v229, %v271
      %v273 = vpop.f32.mrf.mxu0
      %v274 = vpop.f32.mrf.mxu0
      %275 = vdwg.mxu0
      %v276 = vsub.f32 0.0, %v270
      %v277 = vsub.f32 0.0, %v272
      %v278 = vmul.f32 %v276, 1.442695
      %v279 = vpow.pop %v278
      %v280 = vmul.f32 %v277, 1.442695
      %v281 = vpow.pop %v280
      %v282 = vadd.f32 %v279, 1.0
      %v283 = vadd.f32 %v281, 1.0
      %v284 = vrcp.pop %v282
      %v285 = vrcp.pop %v283
      %v288 = vcombine.low %v284, %v285
      %290 = vst [vmem:[%s208] sm:$0x77] %v288
      %s291 = smul.u32 2, %s19
      %p292 = scmp.lt.s32.totalorder %s18, 1
      %s293 = scalar_select %p292, %s18, 1
      %p294 = scmp.lt.s32.totalorder %s291, 1
      %s295 = scalar_select %p294, %s291, 1
      %s296 = smul.addr %s293, 2
      %s297 = sadd.s32 %s295, %s296
      %s298 = smul.addr %s297, 4
      %s299 = scalar_lea.vmem %s3, %s298
      // Predicated region
      $region33: #{forward.1} parent=31 // pred_check
        %p300 = pneg %p116
      $region34: #{forward.1} parent=31 // pred_check_branch
        %302 = sbr.rel (%p300) target = $region36
      $region35: #{forward.1} parent=31 // pred_region
        %s303 = smul.u32 2, %s19
      $region36: #{forward.1} parent=31 // pred_fallthru
        _
    $region32: #{forward.1} parent=5 // pred_fallthru
      _
    %p304 = scmp.le.s32.totalorder 2, %s9
    // Predicated region
    $region37: #{forward.1} parent=5 // pred_check
      %p305 = pneg %p304
    $region38: #{forward.1} parent=5 // pred_check_branch
      %307 = sbr.rel (%p305) target = $region40
    $region39: #{forward.1} parent=5 // pred_region
      %s308 = ssub.s32 %s9, 2
      // Predicated region
      $region41: #{forward.1} parent=39 // pred_check
        %p309 = pneg %p122
      $region42: #{forward.1} parent=39 // pred_check_branch
        %311 = sbr.rel (%p309) target = $region44
      $region43: #{forward.1} parent=39 // pred_region
        %s312 = smul.u32 2, %s21
        %p313 = scmp.lt.s32.totalorder %s20, 1
        %s314 = scalar_select %p313, %s20, 1
        %p315 = scmp.lt.s32.totalorder %s312, 1
        %s316 = scalar_select %p315, %s312, 1
        %s317 = smul.addr %s314, 2
        %s318 = sadd.s32 %s316, %s317
        %s319 = smul.addr %s318, 4
        %s320 = scalar_lea.vmem %s3, %s319
      $region44: #{forward.1} parent=39 // pred_fallthru
        _
    $region40: #{forward.1} parent=5 // pred_fallthru
      _
  $region6: #{forward.1} parent=0 // loop_footer
    %s13 = sadd.s32 1, %s9
  $region7: #{forward.1} parent=0 // loop_footer_branch
    %8 = sbr.rel target = $region3
  $region8: #{forward.1} parent=0 // loop_exit
    _

</llo_original>
